<compile_context>
chip_gen: v7x
topology: tpu7x:2x2x1
jax: 0.10.0
libtpu: 0.0.40
codegen_flags: <defaults>
</compile_context>

<pallas_src>
import jax
import jax.numpy as jnp
from jax.experimental import pallas as pl
from jax.experimental.pallas import tpu as pltpu

BN_EPS = 1e-5
HID1 = 128   # fc1 / fc2 output width
HID2 = 64    # fc3 output width
N_VEC_ROWS = 8


def _round_up(n, m):
    return -(-n // m) * m


def make_critic_kernel(sa_pad):
    """sa_pad = state_size + action_size rounded up to a multiple of 8."""
    R_MID = sa_pad           # start of the [w2x | w3_pad] rows
    R_VEC = sa_pad + HID1    # start of the per-feature vector rows

    def critic_kernel(in_ref, p_ref, out_ref):
        xin = in_ref[...]                                # [B, sa_pad] = (obs|act|0)

        # --- static, aligned slices of the single parameter slab -----------
        w_bd = p_ref[0:R_MID, :]                         # [sa_pad, 256] block-diag
        w2x = p_ref[R_MID:R_VEC, 0:HID1]                 # [128, 128]
        w3 = p_ref[R_MID:R_VEC, HID1:2 * HID1]           # [128, 128] (lanes 64:128 zero)
        gamma = p_ref[R_VEC + 0:R_VEC + 1, 0:HID1]       # [1, 128]
        beta = p_ref[R_VEC + 1:R_VEC + 2, 0:HID1]        # [1, 128]
        b2 = p_ref[R_VEC + 2:R_VEC + 3, 0:HID1]          # [1, 128]
        b3 = p_ref[R_VEC + 3:R_VEC + 4, 0:HID1]          # [1, 128] (zero past lane 64)
        w4 = p_ref[R_VEC + 4:R_VEC + 5, 0:HID1]          # [1, 128] (zero past lane 64)
        b4 = p_ref[R_VEC + 5:R_VEC + 6, 0:1]             # [1, 1]

        # --- fc1 and act@W2a fused into one block-diagonal MXU matmul ------
        h = jnp.dot(xin, w_bd, preferred_element_type=jnp.float32)   # [B, 256]
        h1 = h[:, 0:HID1]                                # obs @ w1
        a2 = h[:, HID1:2 * HID1]                         # act @ w2a

        # --- BatchNorm1d (training mode, biased variance) + ReLU -----------
        mean = jnp.mean(h1, axis=0, keepdims=True)                   # [1, 128]
        mean_sq = jnp.mean(h1 * h1, axis=0, keepdims=True)           # [1, 128]
        var = jnp.maximum(mean_sq - mean * mean, 0.0)
        scale = gamma * jax.lax.rsqrt(var + BN_EPS)                  # [1, 128]
        shift = beta - mean * scale                                  # [1, 128]
        x = jnp.maximum(h1 * scale + shift, 0.0)                     # [B, 128]

        # --- fc2 on concat(x, actions) == x @ W2x + act @ W2a + b2 ---------
        h2 = jnp.maximum(
            jnp.dot(x, w2x, preferred_element_type=jnp.float32) + a2 + b2, 0.0)

        # --- fc3 (weight / bias zero-padded to 128 lanes) -------------------
        h3 = jnp.maximum(
            jnp.dot(h2, w3, preferred_element_type=jnp.float32) + b3, 0.0)

        # --- fc4 as VPU multiply + lane reduction (w4 padding lanes are 0) --
        q = jnp.sum(h3 * w4, axis=1, keepdims=True) + b4             # [B, 1]
        out_ref[...] = q.astype(out_ref.dtype)

    return critic_kernel


def critic_forward(observations, actions, slab):
    """observations: [B, state_size], actions: [B, action_size] -> [B, 1]."""
    B, S = observations.shape
    A = actions.shape[1]
    sa_pad = _round_up(S + A, 8)
    assert slab.shape == (sa_pad + HID1 + N_VEC_ROWS, 2 * HID1), slab.shape

    # Concatenate (and zero-pad to a sublane multiple) in the wrapper so the
    # kernel sees a single input operand.  This is a [B, S+A] f32 copy — noise
    # next to the saved DMA descriptor.
    xin = jnp.concatenate([observations, actions], axis=1)
    if sa_pad != S + A:
        xin = jnp.pad(xin, ((0, 0), (0, sa_pad - (S + A))))

    vmem = pltpu.MemorySpace.VMEM
    return pl.pallas_call(
        make_critic_kernel(sa_pad),
        out_shape=jax.ShapeDtypeStruct((B, 1), jnp.float32),
        # Tiny problem: no grid; every operand is a single full-array VMEM block.
        in_specs=[pl.BlockSpec(memory_space=vmem)] * 2,
        out_specs=pl.BlockSpec(memory_space=vmem),
        compiler_params=pltpu.CompilerParams(vmem_limit_bytes=2 * 1024 * 1024),
    )(xin, slab)


def init_params(key, state_size, action_size):
    """Deterministic synthetic parameters matching the nn.Module shapes
    (weights stored as [in_features, out_features])."""
    ks = jax.random.split(key, 8)

    def uniform(k, shape, fan_in):
        bound = 1.0 / jnp.sqrt(jnp.float32(fan_in))
        return jax.random.uniform(k, shape, jnp.float32, -bound, bound)

    w1 = uniform(ks[0], (state_size, HID1), state_size)      # fc1
    b1 = uniform(ks[1], (HID1,), state_size)
    gamma = jnp.ones((HID1,), jnp.float32)                   # BatchNorm1d(128)
    beta = jnp.zeros((HID1,), jnp.float32)
    fan2 = HID1 + action_size
    w2 = uniform(ks[2], (fan2, HID1), fan2)                  # fc2
    b2 = uniform(ks[3], (HID1,), fan2)
    w3 = uniform(ks[4], (HID1, HID2), HID1)                  # fc3
    b3 = uniform(ks[5], (HID2,), HID1)
    w4 = uniform(ks[6], (HID2, 1), HID2)                     # fc4
    b4 = uniform(ks[7], (1,), HID2)
    return (w1, b1, gamma, beta, w2, b2, w3, b3, w4, b4)


def pack_params(params):
    """Pack every parameter into ONE [sa_pad + 136, 256] f32 slab.

    b1 is intentionally dropped: under training-mode BatchNorm a constant
    per-feature pre-BN bias cancels exactly (it is removed with the batch mean).
    """
    (w1, b1, gamma, beta, w2, b2, w3, b3, w4, b4) = params
    del b1
    S = w1.shape[0]
    A = w2.shape[0] - HID1
    sa_pad = _round_up(S + A, 8)

    w2x = w2[:HID1, :]            # [128, 128]
    w2a = w2[HID1:, :]            # [A, 128]

    # Block-diagonal head: [[w1, 0], [0, w2a]], rows zero-padded to sa_pad.
    bd = jnp.zeros((sa_pad, 2 * HID1), jnp.float32)
    bd = bd.at[:S, :HID1].set(w1)
    bd = bd.at[S:S + A, HID1:].set(w2a)

    # Middle 128 rows: [ w2x | w3 zero-padded to 128 output lanes ].
    w3p = jnp.zeros((HID1, HID1), jnp.float32).at[:, :HID2].set(w3)
    mid = jnp.concatenate([w2x, w3p], axis=1)            # [128, 256]

    # Tail: one (8, 256) tile of per-feature vectors (zero-padded).
    vecs = jnp.zeros((N_VEC_ROWS, 2 * HID1), jnp.float32)
    vecs = vecs.at[0, :HID1].set(gamma)
    vecs = vecs.at[1, :HID1].set(beta)
    vecs = vecs.at[2, :HID1].set(b2)
    vecs = vecs.at[3, :HID2].set(b3)
    vecs = vecs.at[4, :HID2].set(w4[:, 0])
    vecs = vecs.at[5, 0].set(b4[0])

    return jnp.concatenate([bd, mid, vecs], axis=0)      # [sa_pad+136, 256]


def critic_ref(observations, actions, params):
    """Pure-JAX reference: direct transcription of the PyTorch module
    (training-mode BatchNorm, biased variance, eps=1e-5)."""
    (w1, b1, gamma, beta, w2, b2, w3, b3, w4, b4) = params
    h1 = observations @ w1 + b1
    mean = jnp.mean(h1, axis=0, keepdims=True)
    var = jnp.mean((h1 - mean) ** 2, axis=0, keepdims=True)
    x = jnp.maximum((h1 - mean) / jnp.sqrt(var + BN_EPS) * gamma + beta, 0.0)
    xc = jnp.concatenate([x, actions], axis=1)
    h2 = jnp.maximum(xc @ w2 + b2, 0.0)
    h3 = jnp.maximum(h2 @ w3 + b3, 0.0)
    return h3 @ w4 + b4


if __name__ == "__main__":
    # action_size=6 deliberately exercises the non-multiple-of-8 padding path.
    state_size, action_size, batch = 32, 6, 8

    key = jax.random.PRNGKey(0)
    k_obs, k_act, k_par = jax.random.split(key, 3)
    observations = jax.random.normal(k_obs, (batch, state_size), jnp.float32)
    actions = jax.random.normal(k_act, (batch, action_size), jnp.float32)
    params = init_params(k_par, state_size, action_size)
    slab = pack_params(params)

    critic = jax.jit(critic_forward)
    q = critic(observations, actions, slab)
    q = jax.block_until_ready(q)

    q_ref = critic_ref(observations, actions, params)
    assert q.shape == (batch, 1)
    assert jnp.allclose(q, q_ref, atol=1e-4, rtol=1e-4), \
        float(jnp.max(jnp.abs(q - q_ref)))

    print("KERNEL_OK")
</pallas_src>

<mosaic_0001>
module attributes {stable_mosaic.version = 11 : i64} {
  func.func @critic_kernel(%arg0: memref<8x40xf32, #tpu.memory_space<vmem>>, %arg1: memref<176x256xf32, #tpu.memory_space<vmem>>, %arg2: memref<8x1xf32, #tpu.memory_space<vmem>>) attributes {dimension_semantics = [], scalar_prefetch = 0 : i64, scratch_operands = 0 : i64, tpu.core_type = #tpu.core_type<tc>} {
    %c0 = arith.constant 0 : index
    %c0_0 = arith.constant 0 : index
    %0 = vector.load %arg0[%c0, %c0_0] : memref<8x40xf32, #tpu.memory_space<vmem>>, vector<8x40xf32>
    %c0_1 = arith.constant 0 : index
    %c0_2 = arith.constant 0 : index
    %1 = vector.load %arg1[%c0_1, %c0_2] : memref<176x256xf32, #tpu.memory_space<vmem>>, vector<40x256xf32>
    %c40 = arith.constant 40 : index
    %c0_3 = arith.constant 0 : index
    %2 = vector.load %arg1[%c40, %c0_3] : memref<176x256xf32, #tpu.memory_space<vmem>>, vector<128x128xf32>
    %c40_4 = arith.constant 40 : index
    %c128 = arith.constant 128 : index
    %3 = vector.load %arg1[%c40_4, %c128] : memref<176x256xf32, #tpu.memory_space<vmem>>, vector<128x128xf32>
    %c168 = arith.constant 168 : index
    %c0_5 = arith.constant 0 : index
    %4 = vector.load %arg1[%c168, %c0_5] : memref<176x256xf32, #tpu.memory_space<vmem>>, vector<1x128xf32>
    %c169 = arith.constant 169 : index
    %c0_6 = arith.constant 0 : index
    %5 = vector.load %arg1[%c169, %c0_6] : memref<176x256xf32, #tpu.memory_space<vmem>>, vector<1x128xf32>
    %c170 = arith.constant 170 : index
    %c0_7 = arith.constant 0 : index
    %6 = vector.load %arg1[%c170, %c0_7] : memref<176x256xf32, #tpu.memory_space<vmem>>, vector<1x128xf32>
    %c171 = arith.constant 171 : index
    %c0_8 = arith.constant 0 : index
    %7 = vector.load %arg1[%c171, %c0_8] : memref<176x256xf32, #tpu.memory_space<vmem>>, vector<1x128xf32>
    %c172 = arith.constant 172 : index
    %c0_9 = arith.constant 0 : index
    %8 = vector.load %arg1[%c172, %c0_9] : memref<176x256xf32, #tpu.memory_space<vmem>>, vector<1x128xf32>
    %c173 = arith.constant 173 : index
    %c0_10 = arith.constant 0 : index
    %9 = vector.load %arg1[%c173, %c0_10] : memref<176x256xf32, #tpu.memory_space<vmem>>, vector<1x1xf32>
    %cst = arith.constant dense<0.000000e+00> : vector<8x256xf32>
    %10 = tpu.matmul %0, %1, %cst {dimension_numbers = #tpu.dot_dimension_numbers<[1], [0], [0], [1], [0, 0, 1, 1], [], []>} : vector<8x40xf32>, vector<40x256xf32>, vector<8x256xf32> -> vector<8x256xf32>
    %11 = vector.extract_strided_slice %10 {offsets = [0, 0], sizes = [8, 128], strides = [1, 1]} : vector<8x256xf32> to vector<8x128xf32>
    %12 = vector.extract_strided_slice %10 {offsets = [0, 128], sizes = [8, 128], strides = [1, 1]} : vector<8x256xf32> to vector<8x128xf32>
    %cst_11 = arith.constant dense<0.000000e+00> : vector<128xf32>
    %13 = vector.multi_reduction <add>, %11, %cst_11 [0] : vector<8x128xf32> to vector<128xf32>
    %14 = vector.shape_cast %13 : vector<128xf32> to vector<1x128xf32>
    %cst_12 = arith.constant 8.000000e+00 : f32
    %15 = vector.broadcast %cst_12 : f32 to vector<1x128xf32>
    %16 = arith.divf %14, %15 : vector<1x128xf32>
    %17 = arith.mulf %11, %11 : vector<8x128xf32>
    %cst_13 = arith.constant dense<0.000000e+00> : vector<128xf32>
    %18 = vector.multi_reduction <add>, %17, %cst_13 [0] : vector<8x128xf32> to vector<128xf32>
    %19 = vector.shape_cast %18 : vector<128xf32> to vector<1x128xf32>
    %cst_14 = arith.constant 8.000000e+00 : f32
    %20 = vector.broadcast %cst_14 : f32 to vector<1x128xf32>
    %21 = arith.divf %19, %20 : vector<1x128xf32>
    %22 = arith.mulf %16, %16 : vector<1x128xf32>
    %23 = arith.subf %21, %22 : vector<1x128xf32>
    %cst_15 = arith.constant 0.000000e+00 : f32
    %24 = vector.broadcast %cst_15 : f32 to vector<1x128xf32>
    %25 = arith.maximumf %23, %24 : vector<1x128xf32>
    %cst_16 = arith.constant 9.99999974E-6 : f32
    %26 = vector.broadcast %cst_16 : f32 to vector<1x128xf32>
    %27 = arith.addf %25, %26 : vector<1x128xf32>
    %28 = math.rsqrt %27 : vector<1x128xf32>
    %29 = arith.mulf %4, %28 : vector<1x128xf32>
    %30 = arith.mulf %16, %29 : vector<1x128xf32>
    %31 = arith.subf %5, %30 : vector<1x128xf32>
    %32 = vector.broadcast %29 : vector<1x128xf32> to vector<8x128xf32>
    %33 = arith.mulf %11, %32 : vector<8x128xf32>
    %34 = vector.broadcast %31 : vector<1x128xf32> to vector<8x128xf32>
    %35 = arith.addf %33, %34 : vector<8x128xf32>
    %cst_17 = arith.constant 0.000000e+00 : f32
    %36 = vector.broadcast %cst_17 : f32 to vector<8x128xf32>
    %37 = arith.maximumf %35, %36 : vector<8x128xf32>
    %cst_18 = arith.constant dense<0.000000e+00> : vector<8x128xf32>
    %38 = tpu.matmul %37, %2, %cst_18 {dimension_numbers = #tpu.dot_dimension_numbers<[1], [0], [0], [1], [0, 0, 1, 1], [], []>} : vector<8x128xf32>, vector<128x128xf32>, vector<8x128xf32> -> vector<8x128xf32>
    %39 = arith.addf %38, %12 : vector<8x128xf32>
    %40 = vector.broadcast %6 : vector<1x128xf32> to vector<8x128xf32>
    %41 = arith.addf %39, %40 : vector<8x128xf32>
    %cst_19 = arith.constant 0.000000e+00 : f32
    %42 = vector.broadcast %cst_19 : f32 to vector<8x128xf32>
    %43 = arith.maximumf %41, %42 : vector<8x128xf32>
    %cst_20 = arith.constant dense<0.000000e+00> : vector<8x128xf32>
    %44 = tpu.matmul %43, %3, %cst_20 {dimension_numbers = #tpu.dot_dimension_numbers<[1], [0], [0], [1], [0, 0, 1, 1], [], []>} : vector<8x128xf32>, vector<128x128xf32>, vector<8x128xf32> -> vector<8x128xf32>
    %45 = vector.broadcast %7 : vector<1x128xf32> to vector<8x128xf32>
    %46 = arith.addf %44, %45 : vector<8x128xf32>
    %cst_21 = arith.constant 0.000000e+00 : f32
    %47 = vector.broadcast %cst_21 : f32 to vector<8x128xf32>
    %48 = arith.maximumf %46, %47 : vector<8x128xf32>
    %49 = vector.broadcast %8 : vector<1x128xf32> to vector<8x128xf32>
    %50 = arith.mulf %48, %49 : vector<8x128xf32>
    %cst_22 = arith.constant dense<0.000000e+00> : vector<8xf32>
    %51 = vector.multi_reduction <add>, %50, %cst_22 [1] : vector<8x128xf32> to vector<8xf32>
    %52 = vector.shape_cast %51 : vector<8xf32> to vector<8x1xf32>
    %53 = vector.broadcast %9 : vector<1x1xf32> to vector<8x1xf32>
    %54 = arith.addf %52, %53 : vector<8x1xf32>
    %c0_23 = arith.constant 0 : index
    %c0_24 = arith.constant 0 : index
    %55 = vector.load %arg2[%c0_23, %c0_24] : memref<8x1xf32, #tpu.memory_space<vmem>>, vector<8x1xf32>
    tpu.vector_store %arg2[%c0_23, %c0_24], %54 {strides = array<i32>} : memref<8x1xf32, #tpu.memory_space<vmem>>, vector<8x1xf32>,
    return
  }
}

</mosaic_0001>

<llo_original>
// kernel: critic_forward.1
$region0: #{critic_forward.1}
  #allocation0 [shape = 'u32[]', space=smem, size = 0x4, offset = 0x4, fixed_abs, tag = 'smem constant byte address 0x4 - core index']
  #allocation1 [shape = 'u32[144,128]{1,0:T(1,128)}', space=vmem, size = 0x12000, scoped, tag = 'internal scratch']
  %s0 = inlined_call_operand.vmem [shape: f32[8,40], index: 0, kind: input, shape index: {}]
  %s1 = inlined_call_operand.hbm [shape: f32[176,256], index: 1, kind: input, shape index: {}]
  %s2 = inlined_call_operand.vmem [shape: f32[8,1], index: 2, kind: output, shape index: {}]
  %s3 = sld [smem:[#allocation0]]
  $region22: #{critic_forward.1} parent=0
    _
  %s5 = ssub.s32 1, %s3
  %s6 = scalar_select 0, %s5, %s3
  $region1: #{critic_forward.1} parent=0
    #allocation2 [shape = 'u8[180224]{0}', space=vmem, size = 0x2c000, scoped, tag = 'input window, operand 1, single buffered']
    #allocation3 [shape = 's32[1]{0}', space=sflag, size = 0x4, scoped, tag = 'scoped memory for critic_forward.1']
    %7 = vsyncpa [#allocation3], 0
    // Predicated region
    $region2: #{critic_forward.1} parent=1 // pred_check
      _
    $region3: #{critic_forward.1} parent=1 // pred_check_branch
      %9 = sbr.rel (0) target = $region5
    $region4: #{critic_forward.1} parent=1 // pred_region
      _
    $region5: #{critic_forward.1} parent=1 // pred_fallthru
      _
    // Predicated region
    $region6: #{critic_forward.1} parent=1 // pred_check
      _
    $region7: #{critic_forward.1} parent=1 // pred_check_branch
      %11 = sbr.rel (0) target = $region9
    $region8: #{critic_forward.1} parent=1 // pred_region
      %s13 = ssub.s32 5632, 5632
      %14 = vsyncadd [#allocation3], %s13
      %s15 = sshll.u32 [#allocation2], 4
      %s16 = int_to_ptr.vmem [resolvable:$true] %s15
      %21 = dma.hbm_to_vmem [thread:$0]  %s1, 5632, %s16, [#allocation3], 256, 256, 16
    $region9: #{critic_forward.1} parent=1 // pred_fallthru
      _
    // Predicated region
    $region10: #{critic_forward.1} parent=1 // pred_check
      _
    $region11: #{critic_forward.1} parent=1 // pred_check_branch
      %23 = sbr.rel (0) target = $region13
    $region12: #{critic_forward.1} parent=1 // pred_region
      %24 = dma.done [#allocation3], 5632
    $region13: #{critic_forward.1} parent=1 // pred_fallthru
      _
    %v25 = vld [vmem:[%s0] sm:$0xff]
    %v26 = vld [vmem:[#allocation2] sm:$0xff]
    %v27 = vld [vmem:[#allocation2 + $0x8] sm:$0xff]
    %v28 = vld [vmem:[#allocation2 + $0x10] sm:$0xff]
    %v29 = vld [vmem:[#allocation2 + $0x18] sm:$0xff]
    %v30 = vld [vmem:[#allocation2 + $0x20] sm:$0xff]
    %v31 = vld [vmem:[#allocation2 + $0x28] sm:$0xff]
    %v32 = vld [vmem:[#allocation2 + $0x30] sm:$0xff]
    %v33 = vld [vmem:[#allocation2 + $0x38] sm:$0xff]
    %v34 = vld [vmem:[#allocation2 + $0x40] sm:$0xff]
    %v35 = vld [vmem:[#allocation2 + $0x48] sm:$0xff]
    %v36 = vld [vmem:[#allocation2 + $0x50] sm:$0xff]
    %v37 = vld [vmem:[#allocation2 + $0x60] sm:$0xff]
    %v38 = vld [vmem:[#allocation2 + $0x70] sm:$0xff]
    %v39 = vld [vmem:[#allocation2 + $0x80] sm:$0xff]
    %v40 = vld [vmem:[#allocation2 + $0x90] sm:$0xff]
    %v41 = vld [vmem:[#allocation2 + $0xa0] sm:$0xff]
    %v42 = vld [vmem:[#allocation2 + $0xb0] sm:$0xff]
    %v43 = vld [vmem:[#allocation2 + $0xc0] sm:$0xff]
    %v44 = vld [vmem:[#allocation2 + $0xd0] sm:$0xff]
    %v45 = vld [vmem:[#allocation2 + $0xe0] sm:$0xff]
    %v46 = vld [vmem:[#allocation2 + $0xf0] sm:$0xff]
    %v47 = vld [vmem:[#allocation2 + $0x100] sm:$0xff]
    %v48 = vld [vmem:[#allocation2 + $0x110] sm:$0xff]
    %v49 = vld [vmem:[#allocation2 + $0x120] sm:$0xff]
    %v50 = vld [vmem:[#allocation2 + $0x130] sm:$0xff]
    %v51 = vld [vmem:[#allocation2 + $0x140] sm:$0xff]
    %v52 = vld [vmem:[#allocation2 + $0x58] sm:$0xff]
    %v53 = vld [vmem:[#allocation2 + $0x68] sm:$0xff]
    %v54 = vld [vmem:[#allocation2 + $0x78] sm:$0xff]
    %v55 = vld [vmem:[#allocation2 + $0x88] sm:$0xff]
    %v56 = vld [vmem:[#allocation2 + $0x98] sm:$0xff]
    %v57 = vld [vmem:[#allocation2 + $0xa8] sm:$0xff]
    %v58 = vld [vmem:[#allocation2 + $0xb8] sm:$0xff]
    %v59 = vld [vmem:[#allocation2 + $0xc8] sm:$0xff]
    %v60 = vld [vmem:[#allocation2 + $0xd8] sm:$0xff]
    %v61 = vld [vmem:[#allocation2 + $0xe8] sm:$0xff]
    %v62 = vld [vmem:[#allocation2 + $0xf8] sm:$0xff]
    %v63 = vld [vmem:[#allocation2 + $0x108] sm:$0xff]
    %v64 = vld [vmem:[#allocation2 + $0x118] sm:$0xff]
    %v65 = vld [vmem:[#allocation2 + $0x128] sm:$0xff]
    %v66 = vld [vmem:[#allocation2 + $0x138] sm:$0xff]
    %v67 = vld [vmem:[#allocation2 + $0x148] sm:$0xff]
    %v68 = vld [vmem:[#allocation2 + $0x150] ss:$0 sm:$0xff]
    %v69 = vld [vmem:[#allocation2 + $0x151] ss:$0 sm:$0xff]
    %v70 = vld [vmem:[#allocation2 + $0x152] ss:$0 sm:$0xff]
    %v71 = vld [vmem:[#allocation2 + $0x153] ss:$0 sm:$0xff]
    %v72 = vld [vmem:[#allocation2 + $0x154] ss:$0 sm:$0xff]
    %v73 = vld [vmem:[#allocation2 + $0x155] ss:$0 sm:$0xff]
    %vm74 = vcmask 326656
    %v76 = vsel %vm74, %v25, 0
    %78 = vmatprep.subr.mxu0 %v27
    %79 = vmatpush1.msra.mxu0 %v26
    %80 = vmatprep.subr.mxu0 %v29
    %81 = vmatpush1.msra.mxu0 %v28
    %82 = vmatprep.subr.mxu0 %v31
    %83 = vmatpush1.msra.mxu0 %v30
    %84 = vmatprep.subr.mxu0 %v33
    %85 = vmatpush1.msra.mxu0 %v32
    %86 = vmatprep.subr.mxu0 %v35
    %87 = vmatpush1.msra.mxu0 %v34
    %88 = vmatprep.subr.mxu0 0.0
    %89 = vmatpush1.msra.mxu0 0.0
    %90 = vmatprep.subr.mxu0 0.0
    %91 = vmatpush1.msra.mxu0 0.0
    %92 = vmatprep.subr.mxu0 0.0
    %93 = vmatpush1.msra.mxu0 0.0
    %94 = vmatprep.subr.mxu0 0.0
    %95 = vmatpush1.msra.mxu0 0.0
    %96 = vmatprep.subr.mxu0 0.0
    %97 = vmatpush1.msra.mxu0 0.0
    %98 = vmatprep.subr.mxu0 0.0
    %99 = vmatpush1.msra.mxu0 0.0
    %100 = vmatprep.subr.mxu0 0.0
    %101 = vmatpush1.msra.mxu0 0.0
    %102 = vmatprep.subr.mxu0 0.0
    %103 = vmatpush1.msra.mxu0 0.0
    %104 = vmatprep.subr.mxu0 0.0
    %105 = vmatpush1.msra.mxu0 0.0
    %106 = vmatprep.subr.mxu0 0.0
    %107 = vmatpush1.msra.mxu0 0.0
    %108 = vmatprep.subr.mxu0 0.0
    %109 = vmatpush1.msra.mxu0 0.0
    %110 = vmatprep.subr.mxu0 0.0
    %111 = vmatpush1.msra.mxu0 0.0
    %112 = vmatprep.subr.mxu0 0.0
    %113 = vmatpush1.msra.mxu0 0.0
    %114 = vmatprep.subr.mxu0 0.0
    %115 = vmatpush1.msra.mxu0 0.0
    %116 = vmatprep.subr.mxu0 0.0
    %117 = vmatpush1.msra.mxu0 0.0
    %118 = vmatprep.subr.mxu0 0.0
    %119 = vmatpush1.msra.mxu0 0.0
    %120 = vmatprep.subr.mxu0 0.0
    %121 = vmatpush1.msra.mxu0 0.0
    %122 = vmatprep.subr.mxu0 0.0
    %123 = vmatpush1.msra.mxu0 0.0
    %124 = vmatprep.subr.mxu0 0.0
    %125 = vmatpush1.msra.mxu0 0.0
    %126 = vmatprep.subr.mxu0 0.0
    %127 = vmatpush1.msra.mxu0 0.0
    %128 = vmatprep.subr.mxu0 0.0
    %129 = vmatpush1.msra.mxu0 0.0
    %130 = vmatprep.subr.mxu0 0.0
    %131 = vmatpush1.msra.mxu0 0.0
    %132 = vmatprep.subr.mxu0 0.0
    %133 = vmatpush1.msra.mxu0 0.0
    %134 = vmatprep.subr.mxu0 0.0
    %135 = vmatpush1.msra.mxu0 0.0
    %136 = vmatprep.subr.mxu0 0.0
    %137 = vmatpush1.msra.mxu0 0.0
    %138 = vmatprep.subr.mxu0 0.0
    %139 = vmatpush1.msra.mxu0 0.0
    %140 = vmatprep.subr.mxu0 0.0
    %141 = vmatpush1.msra.mxu0 0.0
    %142 = vmatprep.mubr.f32.mxu0 0.0
    %143 = vmatmul.mubr.f32.gmra.mrb[0].mxu0 %v76
    %v144 = vpop.f32.mrb[0].mxu0
    %v145 = vadd.f32 0.0, %v144
    %v146 = vpop.f32.mrb[0].mxu0
    %v147 = vadd.f32 0.0, %v146
    %148 = vdwg.mxu0
    %v149 = vrot.slane %v145, 4
    %v150 = vadd.f32 %v145, %v149
    %v151 = vrot.slane %v150, 2
    %v152 = vadd.f32 %v150, %v151
    %v153 = vrot.slane %v152, 1
    %v154 = vadd.f32 %v152, %v153
    %v155 = vrcp.pop 8.0
    %v156 = vmul.f32 %v154, %v155
    %v157 = vmul.f32 %v145, %v145
    %v158 = vrot.slane %v157, 4
    %v159 = vadd.f32 %v157, %v158
    %v160 = vrot.slane %v159, 2
    %v161 = vadd.f32 %v159, %v160
    %v162 = vrot.slane %v161, 1
    %v163 = vadd.f32 %v161, %v162
    %v164 = vmul.f32 %v163, %v155
    %v165 = vmul.f32 %v156, %v156
    %v166 = vsub.f32 %v164, %v165
    %v167 = vmax.f32 %v166, 0.0
    %v168 = vadd.f32 %v167, 1e-05
    %v169 = vrsqrt.pop %v168
    %v170 = vmul.f32 %v68, %v169
    %v171 = vmul.f32 %v156, %v170
    %v172 = vsub.f32 %v69, %v171
    %v173 = vmul.f32 %v145, %v170
    %v174 = vadd.f32 %v173, %v172
    %v175 = vmax.f32 %v174, 0.0
    %176 = vmatprep.subr.mxu0 0.0
    %177 = vmatpush1.msra.mxu0 %v36
    %178 = vmatprep.subr.mxu0 0.0
    %179 = vmatpush1.msra.mxu0 %v37
    %180 = vmatprep.subr.mxu0 0.0
    %181 = vmatpush1.msra.mxu0 %v38
    %182 = vmatprep.subr.mxu0 0.0
    %183 = vmatpush1.msra.mxu0 %v39
    %184 = vmatprep.subr.mxu0 0.0
    %185 = vmatpush1.msra.mxu0 %v40
    %186 = vmatprep.subr.mxu0 0.0
    %187 = vmatpush1.msra.mxu0 %v41
    %188 = vmatprep.subr.mxu0 0.0
    %189 = vmatpush1.msra.mxu0 %v42
    %190 = vmatprep.subr.mxu0 0.0
    %191 = vmatpush1.msra.mxu0 %v43
    %192 = vmatprep.subr.mxu0 0.0
    %193 = vmatpush1.msra.mxu0 %v44
    %194 = vmatprep.subr.mxu0 0.0
    %195 = vmatpush1.msra.mxu0 %v45
    %196 = vmatprep.subr.mxu0 0.0
    %197 = vmatpush1.msra.mxu0 %v46
    %198 = vmatprep.subr.mxu0 0.0
    %199 = vmatpush1.msra.mxu0 %v47
    %200 = vmatprep.subr.mxu0 0.0
    %201 = vmatpush1.msra.mxu0 %v48
    %202 = vmatprep.subr.mxu0 0.0
    %203 = vmatpush1.msra.mxu0 %v49
    %204 = vmatprep.subr.mxu0 0.0
    %205 = vmatpush1.msra.mxu0 %v50
    %206 = vmatprep.subr.mxu0 0.0
    %207 = vmatpush1.msra.mxu0 %v51
    %208 = vmatprep.subr.mxu0 0.0
    %209 = vmatpush1.msra.mxu0 0.0
    %210 = vmatprep.subr.mxu0 0.0
    %211 = vmatpush1.msra.mxu0 0.0
    %212 = vmatprep.subr.mxu0 0.0
    %213 = vmatpush1.msra.mxu0 0.0
    %214 = vmatprep.subr.mxu0 0.0
    %215 = vmatpush1.msra.mxu0 0.0
    %216 = vmatprep.subr.mxu0 0.0
    %217 = vmatpush1.msra.mxu0 0.0
    %218 = vmatprep.subr.mxu0 0.0
    %219 = vmatpush1.msra.mxu0 0.0
    %220 = vmatprep.subr.mxu0 0.0
    %221 = vmatpush1.msra.mxu0 0.0
    %222 = vmatprep.subr.mxu0 0.0
    %223 = vmatpush1.msra.mxu0 0.0
    %224 = vmatprep.subr.mxu0 0.0
    %225 = vmatpush1.msra.mxu0 0.0
    %226 = vmatprep.subr.mxu0 0.0
    %227 = vmatpush1.msra.mxu0 0.0
    %228 = vmatprep.subr.mxu0 0.0
    %229 = vmatpush1.msra.mxu0 0.0
    %230 = vmatprep.subr.mxu0 0.0
    %231 = vmatpush1.msra.mxu0 0.0
    %232 = vmatprep.subr.mxu0 0.0
    %233 = vmatpush1.msra.mxu0 0.0
    %234 = vmatprep.subr.mxu0 0.0
    %235 = vmatpush1.msra.mxu0 0.0
    %236 = vmatprep.subr.mxu0 0.0
    %237 = vmatpush1.msra.mxu0 0.0
    %238 = vmatprep.subr.mxu0 0.0
    %239 = vmatpush1.msra.mxu0 0.0
    %240 = vmatprep.mubr.f32.mxu0 0.0
    %241 = vmatmul.mubr.f32.gmra.mrb[0].mxu0 %v175
    %v242 = vpop.f32.mrb[0].mxu0
    %v243 = vadd.f32 %v147, %v242
    %v244 = vpop.f32.mrb[0].mxu0
    %245 = vdwg.mxu0
    %v246 = vadd.f32 %v243, %v70
    %v247 = vmax.f32 %v246, 0.0
    %248 = vmatprep.subr.mxu0 0.0
    %249 = vmatpush1.msra.mxu0 %v52
    %250 = vmatprep.subr.mxu0 0.0
    %251 = vmatpush1.msra.mxu0 %v53
    %252 = vmatprep.subr.mxu0 0.0
    %253 = vmatpush1.msra.mxu0 %v54
    %254 = vmatprep.subr.mxu0 0.0
    %255 = vmatpush1.msra.mxu0 %v55
    %256 = vmatprep.subr.mxu0 0.0
    %257 = vmatpush1.msra.mxu0 %v56
    %258 = vmatprep.subr.mxu0 0.0
    %259 = vmatpush1.msra.mxu0 %v57
    %260 = vmatprep.subr.mxu0 0.0
    %261 = vmatpush1.msra.mxu0 %v58
    %262 = vmatprep.subr.mxu0 0.0
    %263 = vmatpush1.msra.mxu0 %v59
    %264 = vmatprep.subr.mxu0 0.0
    %265 = vmatpush1.msra.mxu0 %v60
    %266 = vmatprep.subr.mxu0 0.0
    %267 = vmatpush1.msra.mxu0 %v61
    %268 = vmatprep.subr.mxu0 0.0
    %269 = vmatpush1.msra.mxu0 %v62
    %270 = vmatprep.subr.mxu0 0.0
    %271 = vmatpush1.msra.mxu0 %v63
    %272 = vmatprep.subr.mxu0 0.0
    %273 = vmatpush1.msra.mxu0 %v64
    %274 = vmatprep.subr.mxu0 0.0
    %275 = vmatpush1.msra.mxu0 %v65
    %276 = vmatprep.subr.mxu0 0.0
    %277 = vmatpush1.msra.mxu0 %v66
    %278 = vmatprep.subr.mxu0 0.0
    %279 = vmatpush1.msra.mxu0 %v67
    %280 = vmatprep.subr.mxu0 0.0
    %281 = vmatpush1.msra.mxu0 0.0
    %282 = vmatprep.subr.mxu0 0.0
    %283 = vmatpush1.msra.mxu0 0.0
    %284 = vmatprep.subr.mxu0 0.0
    %285 = vmatpush1.msra.mxu0 0.0
    %286 = vmatprep.subr.mxu0 0.0
    %287 = vmatpush1.msra.mxu0 0.0
    %288 = vmatprep.subr.mxu0 0.0
    %289 = vmatpush1.msra.mxu0 0.0
    %290 = vmatprep.subr.mxu0 0.0
    %291 = vmatpush1.msra.mxu0 0.0
    %292 = vmatprep.subr.mxu0 0.0
    %293 = vmatpush1.msra.mxu0 0.0
    %294 = vmatprep.subr.mxu0 0.0
    %295 = vmatpush1.msra.mxu0 0.0
    %296 = vmatprep.subr.mxu0 0.0
    %297 = vmatpush1.msra.mxu0 0.0
    %298 = vmatprep.subr.mxu0 0.0
    %299 = vmatpush1.msra.mxu0 0.0
    %300 = vmatprep.subr.mxu0 0.0
    %301 = vmatpush1.msra.mxu0 0.0
    %302 = vmatprep.subr.mxu0 0.0
    %303 = vmatpush1.msra.mxu0 0.0
    %304 = vmatprep.subr.mxu0 0.0
    %305 = vmatpush1.msra.mxu0 0.0
    %306 = vmatprep.subr.mxu0 0.0
    %307 = vmatpush1.msra.mxu0 0.0
    %308 = vmatprep.subr.mxu0 0.0
    %309 = vmatpush1.msra.mxu0 0.0
    %310 = vmatprep.subr.mxu0 0.0
    %311 = vmatpush1.msra.mxu0 0.0
    %312 = vmatprep.mubr.f32.mxu0 0.0
    %313 = vmatmul.mubr.f32.gmra.mrb[0].mxu0 %v247
    %v314 = vpop.f32.mrb[0].mxu0
    %v315 = vadd.f32 %v71, %v314
    %v316 = vpop.f32.mrb[0].mxu0
    %317 = vdwg.mxu0
    %v318 = vmax.f32 %v315, 0.0
    %v319 = vmul.f32 %v318, %v72
    %320 = vadd.xlane.f32.xlu0 %v319
    %v321 = vpop.xlane.xlu0 %320
    %v322 = vadd.f32 %v321, %v73
    %vm323 = vcmask 7168
    %324 = vst.msk [vmem:[%s2] sm:$0xff] %vm323, %v322
    // Predicated region
    $region14: #{critic_forward.1} parent=1 // pred_check
      _
    $region15: #{critic_forward.1} parent=1 // pred_check_branch
      %326 = sbr.rel (0) target = $region17
    $region16: #{critic_forward.1} parent=1 // pred_region
      _
    $region17: #{critic_forward.1} parent=1 // pred_fallthru
      _
    // Predicated region
    $region18: #{critic_forward.1} parent=1 // pred_check
      _
    $region19: #{critic_forward.1} parent=1 // pred_check_branch
      %328 = sbr.rel (0) target = $region21
    $region20: #{critic_forward.1} parent=1 // pred_region
      _
    $region21: #{critic_forward.1} parent=1 // pred_fallthru
      _
    %329 = vsyncpa [#allocation3], 1

</llo_original>
